<compile_context>
chip_gen: v7x
topology: tpu7x:2x2x1
jax: 0.10.0
libtpu: 0.0.40
codegen_flags: <defaults>
</compile_context>

<pallas_src>
import jax
import jax.numpy as jnp
from jax.experimental import pallas as pl
from jax.experimental.pallas import tpu as pltpu


def _round_up(x, m):
    return ((x + m - 1) // m) * m


def _cdiv(a, b):
    return -(-a // b)


def tabmlp_kernel(x_ref, w1t_ref, b1_ref, w2t_ref, b2_ref, o_ref):
    # x:   (TB, F)
    # w1t: (F, H_pad)       b1: (1, H_pad)   -- resident across grid steps
    # w2t: (H_pad, C)       b2: (1, C)       -- resident across grid steps
    # o:   (TB, C)          unpadded store (contiguous TB*C*itemsize in HBM)
    x = x_ref[...]
    h = jnp.dot(x, w1t_ref[...], preferred_element_type=jnp.float32) + b1_ref[...]
    h = jnp.maximum(h, 0.0).astype(w2t_ref.dtype)            # ReLU
    out = jnp.dot(h, w2t_ref[...], preferred_element_type=jnp.float32) + b2_ref[...]
    o_ref[...] = out.astype(o_ref.dtype)


def prepare_tabmlp_params(w1, b1, w2, b2, dtype=jnp.float32):
    """One-time parameter prep (hoisted out of the per-call hot path).

    w1: (H, F), b1: (H,), w2: (C, H), b2: (C,)  -- nn.Linear layout.
    Returns (w1t, b1r, w2t, b2r) with the hidden dim zero-padded to 128 lanes.
    """
    H, F = w1.shape
    C = w2.shape[0]
    H_pad = _round_up(H, 128)
    w1t = jnp.zeros((F, H_pad), dtype).at[:, :H].set(w1.T.astype(dtype))
    b1r = jnp.zeros((1, H_pad), dtype).at[:, :H].set(b1.astype(dtype))
    w2t = jnp.zeros((H_pad, C), dtype).at[:H, :].set(w2.T.astype(dtype))
    b2r = jnp.asarray(b2, dtype).reshape(1, C)
    return w1t, b1r, w2t, b2r


def tabmlp_forward(x, params, *, tb_max=1024):
    """x: (B, F) float32/bfloat16; params from prepare_tabmlp_params."""
    w1t, b1r, w2t, b2r = params
    B, F = x.shape
    H_pad = w1t.shape[1]
    C = w2t.shape[1]

    # Batch tile selection:
    #  * B <= tb_max: a single full-array block (block dims == array dims is
    #    always legal, no padding / slicing needed).
    #  * B > tb_max: balanced multiple-of-8 tiles; a non-divisible last tile is
    #    handled by Pallas partial-block clipping (grid = cdiv).
    if B <= tb_max:
        TB = B
    else:
        TB = _round_up(_cdiv(B, _cdiv(B, tb_max)), 8)
    grid = (_cdiv(B, TB),)

    return pl.pallas_call(
        tabmlp_kernel,
        out_shape=jax.ShapeDtypeStruct((B, C), x.dtype),
        grid_spec=pltpu.PrefetchScalarGridSpec(
            num_scalar_prefetch=0,
            grid=grid,
            in_specs=[
                pl.BlockSpec((TB, F), lambda i: (i, 0)),        # x: streamed
                pl.BlockSpec((F, H_pad), lambda i: (0, 0)),     # w1t: resident
                pl.BlockSpec((1, H_pad), lambda i: (0, 0)),     # b1:  resident
                pl.BlockSpec((H_pad, C), lambda i: (0, 0)),     # w2t: resident
                pl.BlockSpec((1, C), lambda i: (0, 0)),         # b2:  resident
            ],
            out_specs=pl.BlockSpec((TB, C), lambda i: (i, 0)),
        ),
        compiler_params=pltpu.CompilerParams(
            # Independent batch tiles -> shard across TensorCores on v7x.
            dimension_semantics=("parallel",),
        ),
    )(x, w1t, b1r, w2t, b2r)


if __name__ == "__main__":
    # Module hyperparameters (from TABMLP.__init__ defaults).
    n_cont_features = 8
    tab_latent_size = 12
    num_classes = 5
    batch = 2

    key = jax.random.PRNGKey(0)
    kx, kw1, kb1, kw2, kb2, kx2 = jax.random.split(key, 6)

    x = jax.random.normal(kx, (batch, n_cont_features), dtype=jnp.float32)

    # Deterministic parameter init (synthetic; shapes match nn.Linear).
    w1 = jax.random.normal(kw1, (tab_latent_size, n_cont_features), jnp.float32) * 0.1
    b1 = jax.random.normal(kb1, (tab_latent_size,), jnp.float32) * 0.1
    w2 = jax.random.normal(kw2, (num_classes, tab_latent_size), jnp.float32) * 0.1
    b2 = jax.random.normal(kb2, (num_classes,), jnp.float32) * 0.1

    # One-time parameter prep (hoisted out of the forward hot path).
    params = prepare_tabmlp_params(w1, b1, w2, b2, dtype=x.dtype)

    def ref_fn(xs):
        return jnp.maximum(xs @ w1.T + b1, 0.0) @ w2.T + b2

    # --- Small-batch path (single full-array block, no padding anywhere). ----
    out = tabmlp_forward(x, params)
    out = jax.block_until_ready(out)
    assert out.shape == (batch, num_classes)
    assert jnp.allclose(out, ref_fn(x), atol=1e-5, rtol=1e-5)

    # --- Multi-tile path (streamed batch tiles, non-divisible last tile). ----
    x_big = jax.random.normal(kx2, (50, n_cont_features), dtype=jnp.float32)
    out_big = tabmlp_forward(x_big, params, tb_max=16)   # grid of 4 tiles: 16,16,16,2
    out_big = jax.block_until_ready(out_big)
    assert out_big.shape == (50, num_classes)
    assert jnp.allclose(out_big, ref_fn(x_big), atol=1e-5, rtol=1e-5)

    print("KERNEL_OK")
</pallas_src>

<mosaic_0001>
module attributes {stable_mosaic.version = 11 : i64} {
  func.func @tabmlp_kernel(%arg0: i32, %arg1: memref<2x8xf32, #tpu.memory_space<vmem>>, %arg2: memref<8x128xf32, #tpu.memory_space<vmem>>, %arg3: memref<1x128xf32, #tpu.memory_space<vmem>>, %arg4: memref<128x5xf32, #tpu.memory_space<vmem>>, %arg5: memref<1x5xf32, #tpu.memory_space<vmem>>, %arg6: memref<2x5xf32, #tpu.memory_space<vmem>>) attributes {dimension_semantics = [#tpu.dimension_semantics<parallel>], iteration_bounds = array<i64: 1>, scalar_prefetch = 0 : i64, scratch_operands = 0 : i64, tpu.core_type = #tpu.core_type<tc>, window_params = [{transform_indices = @transform_0, window_bounds = array<i64: 2, 8>}, {pipeline_mode = #tpu.pipeline_mode<synchronous>, transform_indices = @transform_1, window_bounds = array<i64: 8, 128>}, {pipeline_mode = #tpu.pipeline_mode<synchronous>, transform_indices = @transform_2, window_bounds = array<i64: 1, 128>}, {pipeline_mode = #tpu.pipeline_mode<synchronous>, transform_indices = @transform_3, window_bounds = array<i64: 128, 5>}, {pipeline_mode = #tpu.pipeline_mode<synchronous>, transform_indices = @transform_4, window_bounds = array<i64: 1, 5>}, {transform_indices = @transform_5, window_bounds = array<i64: 2, 5>}]} {
    %c0 = arith.constant 0 : index
    %c0_0 = arith.constant 0 : index
    %0 = vector.load %arg1[%c0, %c0_0] : memref<2x8xf32, #tpu.memory_space<vmem>>, vector<2x8xf32>
    %c0_1 = arith.constant 0 : index
    %c0_2 = arith.constant 0 : index
    %1 = vector.load %arg2[%c0_1, %c0_2] : memref<8x128xf32, #tpu.memory_space<vmem>>, vector<8x128xf32>
    %cst = arith.constant dense<0.000000e+00> : vector<2x128xf32>
    %2 = tpu.matmul %0, %1, %cst {dimension_numbers = #tpu.dot_dimension_numbers<[1], [0], [0], [1], [0, 0, 1, 1], [], []>} : vector<2x8xf32>, vector<8x128xf32>, vector<2x128xf32> -> vector<2x128xf32>
    %c0_3 = arith.constant 0 : index
    %c0_4 = arith.constant 0 : index
    %3 = vector.load %arg3[%c0_3, %c0_4] : memref<1x128xf32, #tpu.memory_space<vmem>>, vector<1x128xf32>
    %4 = vector.broadcast %3 : vector<1x128xf32> to vector<2x128xf32>
    %5 = arith.addf %2, %4 : vector<2x128xf32>
    %cst_5 = arith.constant 0.000000e+00 : f32
    %6 = vector.broadcast %cst_5 : f32 to vector<2x128xf32>
    %7 = arith.maximumf %5, %6 : vector<2x128xf32>
    %c0_6 = arith.constant 0 : index
    %c0_7 = arith.constant 0 : index
    %8 = vector.load %arg4[%c0_6, %c0_7] : memref<128x5xf32, #tpu.memory_space<vmem>>, vector<128x5xf32>
    %cst_8 = arith.constant dense<0.000000e+00> : vector<2x5xf32>
    %9 = tpu.matmul %7, %8, %cst_8 {dimension_numbers = #tpu.dot_dimension_numbers<[1], [0], [0], [1], [0, 0, 1, 1], [], []>} : vector<2x128xf32>, vector<128x5xf32>, vector<2x5xf32> -> vector<2x5xf32>
    %c0_9 = arith.constant 0 : index
    %c0_10 = arith.constant 0 : index
    %10 = vector.load %arg5[%c0_9, %c0_10] : memref<1x5xf32, #tpu.memory_space<vmem>>, vector<1x5xf32>
    %11 = vector.broadcast %10 : vector<1x5xf32> to vector<2x5xf32>
    %12 = arith.addf %9, %11 : vector<2x5xf32>
    %c0_11 = arith.constant 0 : index
    %c0_12 = arith.constant 0 : index
    %13 = vector.load %arg6[%c0_11, %c0_12] : memref<2x5xf32, #tpu.memory_space<vmem>>, vector<2x5xf32>
    tpu.vector_store %arg6[%c0_11, %c0_12], %12 {strides = array<i32>} : memref<2x5xf32, #tpu.memory_space<vmem>>, vector<2x5xf32>,
    return
  }
  func.func @transform_0(%arg0: i32) -> (i32, i32) {
    %c0_i32 = arith.constant 0 : i32
    %c0_i32_0 = arith.constant 0 : i32
    return %arg0, %c0_i32 : i32, i32
  }
  func.func @transform_1(%arg0: i32) -> (i32, i32) {
    %c0_i32 = arith.constant 0 : i32
    %c0_i32_0 = arith.constant 0 : i32
    %c0_i32_1 = arith.constant 0 : i32
    return %c0_i32, %c0_i32_0 : i32, i32
  }
  func.func @transform_2(%arg0: i32) -> (i32, i32) {
    %c0_i32 = arith.constant 0 : i32
    %c0_i32_0 = arith.constant 0 : i32
    %c0_i32_1 = arith.constant 0 : i32
    return %c0_i32, %c0_i32_0 : i32, i32
  }
  func.func @transform_3(%arg0: i32) -> (i32, i32) {
    %c0_i32 = arith.constant 0 : i32
    %c0_i32_0 = arith.constant 0 : i32
    %c0_i32_1 = arith.constant 0 : i32
    return %c0_i32, %c0_i32_0 : i32, i32
  }
  func.func @transform_4(%arg0: i32) -> (i32, i32) {
    %c0_i32 = arith.constant 0 : i32
    %c0_i32_0 = arith.constant 0 : i32
    %c0_i32_1 = arith.constant 0 : i32
    return %c0_i32, %c0_i32_0 : i32, i32
  }
  func.func @transform_5(%arg0: i32) -> (i32, i32) {
    %c0_i32 = arith.constant 0 : i32
    %c0_i32_0 = arith.constant 0 : i32
    return %arg0, %c0_i32 : i32, i32
  }
}

</mosaic_0001>

<llo_original>
// kernel: tpu_custom_call.1
$region0: #{tpu_custom_call.1}
  #allocation0 [shape = 'u32[]', space=smem, size = 0x4, offset = 0x4, fixed_abs, tag = 'smem constant byte address 0x4 - core index']
  #allocation1 [shape = 'u32[144,128]{1,0:T(1,128)}', space=vmem, size = 0x12000, scoped, tag = 'internal scratch']
  %s0 = inlined_call_operand.vmem [shape: f32[2,8], index: 0, kind: input, shape index: {}]
  %s1 = inlined_call_operand.vmem [shape: f32[8,128], index: 1, kind: input, shape index: {}]
  %s2 = inlined_call_operand.vmem [shape: f32[1,128], index: 2, kind: input, shape index: {}]
  %s3 = inlined_call_operand.vmem [shape: f32[128,5], index: 3, kind: input, shape index: {}]
  %s4 = inlined_call_operand.vmem [shape: f32[1,5], index: 4, kind: input, shape index: {}]
  %s5 = inlined_call_operand.hbm [shape: f32[2,5], index: 5, kind: output, shape index: {}]
  %s6 = sld [smem:[#allocation0]]
  $region30: #{tpu_custom_call.1} parent=0
    _
  %s8 = ssub.s32 1, %s6
  %s9 = scalar_select 0, %s8, %s6
  $region1: #{tpu_custom_call.1} parent=0
    #allocation2 [shape = 'u8[1024]{0}', space=vmem, size = 0x400, scoped, tag = 'output window, operand 0, single buffered']
    #allocation3 [shape = 's32[1]{0}', space=sflag, size = 0x4, scoped, tag = 'scoped memory for tpu_custom_call.1']
    %10 = vsyncpa [#allocation3], 0
    // Predicated region
    $region2: #{tpu_custom_call.1} parent=1 // pred_check
      _
    $region3: #{tpu_custom_call.1} parent=1 // pred_check_branch
      %12 = sbr.rel (0) target = $region5
    $region4: #{tpu_custom_call.1} parent=1 // pred_region
      _
    $region5: #{tpu_custom_call.1} parent=1 // pred_fallthru
      _
    // Predicated region
    $region6: #{tpu_custom_call.1} parent=1 // pred_check
      _
    $region7: #{tpu_custom_call.1} parent=1 // pred_check_branch
      %14 = sbr.rel (0) target = $region9
    $region8: #{tpu_custom_call.1} parent=1 // pred_region
      _
    $region9: #{tpu_custom_call.1} parent=1 // pred_fallthru
      _
    // Predicated region
    $region10: #{tpu_custom_call.1} parent=1 // pred_check
      _
    $region11: #{tpu_custom_call.1} parent=1 // pred_check_branch
      %16 = sbr.rel (0) target = $region13
    $region12: #{tpu_custom_call.1} parent=1 // pred_region
      _
    $region13: #{tpu_custom_call.1} parent=1 // pred_fallthru
      _
    // Predicated region
    $region14: #{tpu_custom_call.1} parent=1 // pred_check
      _
    $region15: #{tpu_custom_call.1} parent=1 // pred_check_branch
      %18 = sbr.rel (0) target = $region17
    $region16: #{tpu_custom_call.1} parent=1 // pred_region
      _
    $region17: #{tpu_custom_call.1} parent=1 // pred_fallthru
      _
    // Predicated region
    $region18: #{tpu_custom_call.1} parent=1 // pred_check
      _
    $region19: #{tpu_custom_call.1} parent=1 // pred_check_branch
      %20 = sbr.rel (0) target = $region21
    $region20: #{tpu_custom_call.1} parent=1 // pred_region
      _
    $region21: #{tpu_custom_call.1} parent=1 // pred_fallthru
      _
    %v21 = vld [vmem:[%s0] sm:$0x3]
    %v22 = vld [vmem:[%s1] sm:$0xff]
    %v23 = vld [vmem:[%s2] sm:$0x1]
    %v25 = vlaneseq
    %v26 = vshrl.u32 %v25, 7
    %v27 = vsub.s32 0, %v26
    %v28 = vrot.slane %v23, %v27
    %vm30 = vcmask 64512
    %v32 = vsel %vm30, %v21, 0
    %34 = vmatprep.subr.mxu0 0.0
    %35 = vmatpush1.msra.mxu0 %v22
    %36 = vmatprep.subr.mxu0 0.0
    %37 = vmatpush1.msra.mxu0 0.0
    %38 = vmatprep.subr.mxu0 0.0
    %39 = vmatpush1.msra.mxu0 0.0
    %40 = vmatprep.subr.mxu0 0.0
    %41 = vmatpush1.msra.mxu0 0.0
    %42 = vmatprep.subr.mxu0 0.0
    %43 = vmatpush1.msra.mxu0 0.0
    %44 = vmatprep.subr.mxu0 0.0
    %45 = vmatpush1.msra.mxu0 0.0
    %46 = vmatprep.subr.mxu0 0.0
    %47 = vmatpush1.msra.mxu0 0.0
    %48 = vmatprep.subr.mxu0 0.0
    %49 = vmatpush1.msra.mxu0 0.0
    %50 = vmatprep.subr.mxu0 0.0
    %51 = vmatpush1.msra.mxu0 0.0
    %52 = vmatprep.subr.mxu0 0.0
    %53 = vmatpush1.msra.mxu0 0.0
    %54 = vmatprep.subr.mxu0 0.0
    %55 = vmatpush1.msra.mxu0 0.0
    %56 = vmatprep.subr.mxu0 0.0
    %57 = vmatpush1.msra.mxu0 0.0
    %58 = vmatprep.subr.mxu0 0.0
    %59 = vmatpush1.msra.mxu0 0.0
    %60 = vmatprep.subr.mxu0 0.0
    %61 = vmatpush1.msra.mxu0 0.0
    %62 = vmatprep.subr.mxu0 0.0
    %63 = vmatpush1.msra.mxu0 0.0
    %64 = vmatprep.subr.mxu0 0.0
    %65 = vmatpush1.msra.mxu0 0.0
    %66 = vmatprep.subr.mxu0 0.0
    %67 = vmatpush1.msra.mxu0 0.0
    %68 = vmatprep.subr.mxu0 0.0
    %69 = vmatpush1.msra.mxu0 0.0
    %70 = vmatprep.subr.mxu0 0.0
    %71 = vmatpush1.msra.mxu0 0.0
    %72 = vmatprep.subr.mxu0 0.0
    %73 = vmatpush1.msra.mxu0 0.0
    %74 = vmatprep.subr.mxu0 0.0
    %75 = vmatpush1.msra.mxu0 0.0
    %76 = vmatprep.subr.mxu0 0.0
    %77 = vmatpush1.msra.mxu0 0.0
    %78 = vmatprep.subr.mxu0 0.0
    %79 = vmatpush1.msra.mxu0 0.0
    %80 = vmatprep.subr.mxu0 0.0
    %81 = vmatpush1.msra.mxu0 0.0
    %82 = vmatprep.subr.mxu0 0.0
    %83 = vmatpush1.msra.mxu0 0.0
    %84 = vmatprep.subr.mxu0 0.0
    %85 = vmatpush1.msra.mxu0 0.0
    %86 = vmatprep.subr.mxu0 0.0
    %87 = vmatpush1.msra.mxu0 0.0
    %88 = vmatprep.subr.mxu0 0.0
    %89 = vmatpush1.msra.mxu0 0.0
    %90 = vmatprep.subr.mxu0 0.0
    %91 = vmatpush1.msra.mxu0 0.0
    %92 = vmatprep.subr.mxu0 0.0
    %93 = vmatpush1.msra.mxu0 0.0
    %94 = vmatprep.subr.mxu0 0.0
    %95 = vmatpush1.msra.mxu0 0.0
    %96 = vmatprep.subr.mxu0 0.0
    %97 = vmatpush1.msra.mxu0 0.0
    %98 = vmatprep.mubr.f32.mxu0 0.0
    %99 = vmatmul.mubr.f32.gmra.mrb[0].mxu0 %v32
    %v100 = vpop.f32.mrb[0].mxu0
    %v101 = vadd.f32 %v28, %v100
    %v102 = vpop.f32.mrb[0].mxu0
    %103 = vdwg.mxu0
    %v104 = vmax.f32 %v101, 0.0
    %v105 = vld [vmem:[%s3] sm:$0xff]
    %v106 = vld [vmem:[%s3 + $0x8] sm:$0xff]
    %v107 = vld [vmem:[%s3 + $0x10] sm:$0xff]
    %v108 = vld [vmem:[%s3 + $0x18] sm:$0xff]
    %v109 = vld [vmem:[%s3 + $0x20] sm:$0xff]
    %v110 = vld [vmem:[%s3 + $0x28] sm:$0xff]
    %v111 = vld [vmem:[%s3 + $0x30] sm:$0xff]
    %v112 = vld [vmem:[%s3 + $0x38] sm:$0xff]
    %v113 = vld [vmem:[%s3 + $0x40] sm:$0xff]
    %v114 = vld [vmem:[%s3 + $0x48] sm:$0xff]
    %v115 = vld [vmem:[%s3 + $0x50] sm:$0xff]
    %v116 = vld [vmem:[%s3 + $0x58] sm:$0xff]
    %v117 = vld [vmem:[%s3 + $0x60] sm:$0xff]
    %v118 = vld [vmem:[%s3 + $0x68] sm:$0xff]
    %v119 = vld [vmem:[%s3 + $0x70] sm:$0xff]
    %v120 = vld [vmem:[%s3 + $0x78] sm:$0xff]
    %v121 = vld [vmem:[%s4] sm:$0x1]
    %v123 = vlaneseq
    %v124 = vshrl.u32 %v123, 7
    %v125 = vsub.s32 0, %v124
    %v126 = vrot.slane %v121, %v125
    %128 = vmatprep.subr.mxu0 0.0
    %129 = vmatpush1.msra.mxu0 %v105
    %130 = vmatprep.subr.mxu0 0.0
    %131 = vmatpush1.msra.mxu0 %v106
    %132 = vmatprep.subr.mxu0 0.0
    %133 = vmatpush1.msra.mxu0 %v107
    %134 = vmatprep.subr.mxu0 0.0
    %135 = vmatpush1.msra.mxu0 %v108
    %136 = vmatprep.subr.mxu0 0.0
    %137 = vmatpush1.msra.mxu0 %v109
    %138 = vmatprep.subr.mxu0 0.0
    %139 = vmatpush1.msra.mxu0 %v110
    %140 = vmatprep.subr.mxu0 0.0
    %141 = vmatpush1.msra.mxu0 %v111
    %142 = vmatprep.subr.mxu0 0.0
    %143 = vmatpush1.msra.mxu0 %v112
    %144 = vmatprep.subr.mxu0 0.0
    %145 = vmatpush1.msra.mxu0 %v113
    %146 = vmatprep.subr.mxu0 0.0
    %147 = vmatpush1.msra.mxu0 %v114
    %148 = vmatprep.subr.mxu0 0.0
    %149 = vmatpush1.msra.mxu0 %v115
    %150 = vmatprep.subr.mxu0 0.0
    %151 = vmatpush1.msra.mxu0 %v116
    %152 = vmatprep.subr.mxu0 0.0
    %153 = vmatpush1.msra.mxu0 %v117
    %154 = vmatprep.subr.mxu0 0.0
    %155 = vmatpush1.msra.mxu0 %v118
    %156 = vmatprep.subr.mxu0 0.0
    %157 = vmatpush1.msra.mxu0 %v119
    %158 = vmatprep.subr.mxu0 0.0
    %159 = vmatpush1.msra.mxu0 %v120
    %160 = vmatprep.subr.mxu0 0.0
    %161 = vmatpush1.msra.mxu0 0.0
    %162 = vmatprep.subr.mxu0 0.0
    %163 = vmatpush1.msra.mxu0 0.0
    %164 = vmatprep.subr.mxu0 0.0
    %165 = vmatpush1.msra.mxu0 0.0
    %166 = vmatprep.subr.mxu0 0.0
    %167 = vmatpush1.msra.mxu0 0.0
    %168 = vmatprep.subr.mxu0 0.0
    %169 = vmatpush1.msra.mxu0 0.0
    %170 = vmatprep.subr.mxu0 0.0
    %171 = vmatpush1.msra.mxu0 0.0
    %172 = vmatprep.subr.mxu0 0.0
    %173 = vmatpush1.msra.mxu0 0.0
    %174 = vmatprep.subr.mxu0 0.0
    %175 = vmatpush1.msra.mxu0 0.0
    %176 = vmatprep.subr.mxu0 0.0
    %177 = vmatpush1.msra.mxu0 0.0
    %178 = vmatprep.subr.mxu0 0.0
    %179 = vmatpush1.msra.mxu0 0.0
    %180 = vmatprep.subr.mxu0 0.0
    %181 = vmatpush1.msra.mxu0 0.0
    %182 = vmatprep.subr.mxu0 0.0
    %183 = vmatpush1.msra.mxu0 0.0
    %184 = vmatprep.subr.mxu0 0.0
    %185 = vmatpush1.msra.mxu0 0.0
    %186 = vmatprep.subr.mxu0 0.0
    %187 = vmatpush1.msra.mxu0 0.0
    %188 = vmatprep.subr.mxu0 0.0
    %189 = vmatpush1.msra.mxu0 0.0
    %190 = vmatprep.subr.mxu0 0.0
    %191 = vmatpush1.msra.mxu0 0.0
    %192 = vmatprep.mubr.f32.mxu0 0.0
    %193 = vmatmul.mubr.f32.gmra.mrb[0].mxu0 %v104
    %v194 = vpop.f32.mrb[0].mxu0
    %v195 = vadd.f32 %v126, %v194
    %v196 = vpop.f32.mrb[0].mxu0
    %197 = vdwg.mxu0
    %vm198 = vcmask 33792
    %199 = vst.msk [vmem:[#allocation2] sm:$0x3] %vm198, %v195
    // Predicated region
    $region22: #{tpu_custom_call.1} parent=1 // pred_check
      _
    $region23: #{tpu_custom_call.1} parent=1 // pred_check_branch
      %201 = sbr.rel (0) target = $region25
    $region24: #{tpu_custom_call.1} parent=1 // pred_region
      %s203 = ssub.s32 32, 32
      %204 = vsyncadd [#allocation3], %s203
      %s206 = sshll.u32 [#allocation2], 4
      %s207 = int_to_ptr.vmem [resolvable:$true] %s206
      %209 = dma.vmem_to_hbm [thread:$0]  %s207, 32, %s5, [#allocation3]
    $region25: #{tpu_custom_call.1} parent=1 // pred_fallthru
      _
    // Predicated region
    $region26: #{tpu_custom_call.1} parent=1 // pred_check
      _
    $region27: #{tpu_custom_call.1} parent=1 // pred_check_branch
      %211 = sbr.rel (0) target = $region29
    $region28: #{tpu_custom_call.1} parent=1 // pred_region
      %212 = dma.done [#allocation3], 32
    $region29: #{tpu_custom_call.1} parent=1 // pred_fallthru
      _
    %213 = vsyncpa [#allocation3], 1

</llo_original>
